<compile_context>
chip_gen: v7x
topology: tpu7x:2x2x1
jax: 0.10.0
libtpu: 0.0.40
codegen_flags: <defaults>
</compile_context>

<pallas_src>
import jax
import jax.numpy as jnp
from jax.experimental import pallas as pl
from jax.experimental.pallas import tpu as pltpu


LAYER_NORM_EPS = 1e-12
# Keep W fully VMEM-resident while its bf16 copy stays well under the per-core
# budget; above this, tile the K (H_in) axis with 256-wide slabs.
_W_RESIDENT_BYTES_MAX = 16 * 1024 * 1024


def _round_up(x, m):
    return ((x + m - 1) // m) * m


def _vmem_ceiling_bytes():
    """~25% headroom under this chip's physical VMEM (48 MiB fallback, v7x-safe)."""
    try:
        cap = getattr(pltpu.get_tpu_info(), "vmem_capacity_bytes", 0)
        if cap:
            return int(cap) * 3 // 4
    except Exception:
        pass
    return 48 * 1024 * 1024


def _resident_spec(shape, index_map, single_buffer):
    """BlockSpec for an operand whose index_map is constant (never re-DMA'd).

    When supported, request a single VMEM buffer instead of Pallas' default
    double-buffering (saves a full extra copy of W / the LN vectors in VMEM).
    """
    if single_buffer:
        try:
            return pl.BlockSpec(shape, index_map, pipeline_mode=pl.Buffered(1))
        except (AttributeError, TypeError):
            pass
    return pl.BlockSpec(shape, index_map)


def _layernorm_finalize(h, gamma, beta, inv_n, out_dtype):
    """BertLayerNorm over the real hidden width, single fused reduction pass.

    Padded output lanes of `h` are exactly zero (padded W columns and padded
    bias are zero), so sum(h) and sum(h*h) over the padded width already equal
    the sums over the real width -- no lane mask is needed anywhere.  var is
    clamped >= 0 because the one-pass E[h^2]-mean^2 form can go slightly
    negative and eps=1e-12 offers no protection.
    """
    s1 = jnp.sum(h, axis=-1, keepdims=True)
    s2 = jnp.sum(h * h, axis=-1, keepdims=True)
    mean = s1 * inv_n
    var = jnp.maximum(s2 * inv_n - mean * mean, 0.0)
    normed = (h - mean) * jax.lax.rsqrt(var + LAYER_NORM_EPS)
    # Padded columns have gamma = beta = 0 -> exact zeros written there.
    return (normed * gamma + beta).astype(out_dtype)


def _make_resident_kernel(h_out_real):
    """W fully VMEM-resident: one MXU matmul + fused LayerNorm per token tile."""
    inv_n = 1.0 / float(h_out_real)

    def kernel(x_ref, w_ref, b_ref, gamma_ref, beta_ref, o_ref):
        x = x_ref[...].astype(jnp.bfloat16)          # cast at the MXU, not in HBM
        h = jnp.dot(x, w_ref[...], preferred_element_type=jnp.float32) + b_ref[...]
        o_ref[...] = _layernorm_finalize(h, gamma_ref[...], beta_ref[...],
                                         jnp.float32(inv_n), o_ref.dtype)

    return kernel


def _make_ktiled_kernel(h_out_real):
    """K (H_in) tiled: f32 scratch accumulator, init/finalize via pl.when."""
    inv_n = 1.0 / float(h_out_real)

    def kernel(x_ref, w_ref, b_ref, gamma_ref, beta_ref, o_ref, acc_ref):
        k = pl.program_id(1)

        @pl.when(k == 0)
        def _():
            acc_ref[...] = jnp.zeros_like(acc_ref)

        x = x_ref[...].astype(jnp.bfloat16)
        acc_ref[...] += jnp.dot(x, w_ref[...], preferred_element_type=jnp.float32)

        @pl.when(k == pl.num_programs(1) - 1)
        def _():
            h = acc_ref[...] + b_ref[...]
            o_ref[...] = _layernorm_finalize(h, gamma_ref[...], beta_ref[...],
                                             jnp.float32(inv_n), o_ref.dtype)

    return kernel


def _pallas_linear_layernorm(x2d, w_p, b_p, g_p, be_p, *, tm, tk, n_tiles, n_k,
                             h_out_real, out_dtype, single_buffer_resident):
    T_p, H_in_p = x2d.shape
    H_out_p = w_p.shape[1]

    x_bytes = x2d.dtype.itemsize
    out_bytes = jnp.dtype(out_dtype).itemsize

    # VMEM budget: moving x/out blocks are double-buffered by Pallas; resident
    # (constant-index) operands single-buffered when supported.
    res_mult = 1 if single_buffer_resident else 2
    vmem_needed = (
        2 * tm * tk * x_bytes                                 # x tile
        + 2 * tm * H_out_p * out_bytes                        # out tile (bf16)
        + (res_mult if n_k == 1 else 2) * tk * H_out_p * 2    # W slab (bf16)
        + res_mult * 3 * H_out_p * 4                          # b / gamma / beta
        + (tm * H_out_p * 4 if n_k > 1 else 0)                # f32 accumulator
    )
    vmem_limit = int(min(max(vmem_needed * 3 // 2, 32 * 1024 * 1024),
                         _vmem_ceiling_bytes()))

    cost = pl.CostEstimate(
        flops=2 * T_p * H_in_p * H_out_p,
        transcendentals=T_p,  # one rsqrt per token row
        bytes_accessed=(T_p * H_in_p * x_bytes + H_in_p * H_out_p * 2
                        + T_p * H_out_p * out_bytes + 3 * H_out_p * 4),
    )

    if n_k == 1:
        const_map = lambda i: (0, 0)
        kernel = _make_resident_kernel(h_out_real)
        grid = (n_tiles,)
        in_specs = [
            pl.BlockSpec((tm, H_in_p), lambda i: (i, 0)),            # x tile moves
            _resident_spec((H_in_p, H_out_p), const_map,
                           single_buffer_resident),                  # W resident
            _resident_spec((1, H_out_p), const_map, single_buffer_resident),
            _resident_spec((1, H_out_p), const_map, single_buffer_resident),
            _resident_spec((1, H_out_p), const_map, single_buffer_resident),
        ]
        out_spec = pl.BlockSpec((tm, H_out_p), lambda i: (i, 0))
        scratch = []
        semantics = ("parallel",)          # v7x shards token tiles over 2 TCs
    else:
        const_map = lambda i, k: (0, 0)
        kernel = _make_ktiled_kernel(h_out_real)
        grid = (n_tiles, n_k)              # reduction axis last
        in_specs = [
            pl.BlockSpec((tm, tk), lambda i, k: (i, k)),             # x tile moves
            pl.BlockSpec((tk, H_out_p), lambda i, k: (k, 0)),        # W K-slab moves
            _resident_spec((1, H_out_p), const_map, single_buffer_resident),
            _resident_spec((1, H_out_p), const_map, single_buffer_resident),
            _resident_spec((1, H_out_p), const_map, single_buffer_resident),
        ]
        out_spec = pl.BlockSpec((tm, H_out_p), lambda i, k: (i, 0))
        scratch = [pltpu.VMEM((tm, H_out_p), jnp.float32)]
        semantics = ("parallel", "arbitrary")

    return pl.pallas_call(
        kernel,
        out_shape=jax.ShapeDtypeStruct((T_p, H_out_p), out_dtype),
        grid_spec=pltpu.PrefetchScalarGridSpec(
            num_scalar_prefetch=0,
            grid=grid,
            in_specs=in_specs,
            out_specs=out_spec,
            scratch_shapes=scratch,
        ),
        compiler_params=pltpu.CompilerParams(
            dimension_semantics=semantics,
            vmem_limit_bytes=vmem_limit,
        ),
        cost_estimate=cost,
    )(x2d, w_p, b_p, g_p, be_p)


def linear_layernorm(x, w, b, gamma, beta, *, tm=None, tk=None,
                     out_dtype=jnp.bfloat16):
    """y = BertLayerNorm(x @ W + b).

    x: (B, S, H_in) f32 or bf16; w: (H_in, H_out); b/gamma/beta: (1, H_out) or
    (H_out,).  Returns (B, S, H_out) in `out_dtype` (bf16 by default -> half
    the output HBM write bytes).
    """
    B, S, H_in = x.shape
    H_out = w.shape[1]
    T = B * S

    # Lane-dense padding of hidden dims to multiples of 128.
    H_out_p = _round_up(H_out, 128)
    H_in_p = _round_up(H_in, 128)

    # K (H_in) tiling once a resident bf16 W would blow the VMEM budget.
    if tk is None:
        tk = 256 if H_in_p * H_out_p * 2 > _W_RESIDENT_BYTES_MAX else H_in_p
    tk = min(_round_up(tk, 128), H_in_p)
    H_in_p = _round_up(H_in_p, tk)
    n_k = H_in_p // tk

    # Token tile: 512 rows for large T (85%+ of HBM roofline on v6e, fits the
    # 128 MiB VMEM generations easily); otherwise split into >= 2 tiles so both
    # v7x TensorCores get work.  Always a multiple of 16 (bf16 sublane pack).
    if tm is None:
        if T >= 1024:
            tm = 512
        elif T >= 32:
            tm = _round_up(-(-T // 2), 16)
        else:
            tm = 16
    tm = _round_up(tm, 16)
    T_p = _round_up(T, tm)
    n_tiles = T_p // tm

    # Pad only -- no wrapper dtype cast for x (the kernel casts to bf16 at the
    # MXU), so x is read from HBM exactly once.
    x2d = jnp.pad(x.reshape(T, H_in), ((0, T_p - T), (0, H_in_p - H_in)))
    w_p = jnp.pad(w.astype(jnp.bfloat16),
                  ((0, H_in_p - H_in), (0, H_out_p - H_out)))
    b_p = jnp.pad(jnp.asarray(b, jnp.float32).reshape(1, -1),
                  ((0, 0), (0, H_out_p - H_out)))
    g_p = jnp.pad(jnp.asarray(gamma, jnp.float32).reshape(1, -1),
                  ((0, 0), (0, H_out_p - H_out)))
    be_p = jnp.pad(jnp.asarray(beta, jnp.float32).reshape(1, -1),
                   ((0, 0), (0, H_out_p - H_out)))

    def run(single_buffer_resident):
        return _pallas_linear_layernorm(
            x2d, w_p, b_p, g_p, be_p,
            tm=tm, tk=tk, n_tiles=n_tiles, n_k=n_k,
            h_out_real=H_out, out_dtype=out_dtype,
            single_buffer_resident=single_buffer_resident)

    try:
        out = run(True)
    except Exception:
        # pl.Buffered(1) single-buffering unsupported on this JAX/TPU build:
        # fall back to default double-buffered resident operands.
        out = run(False)

    return out[:T, :H_out].reshape(B, S, H_out)


def init_weights(key, hidden_in, hidden_out, initializer_range=0.02):
    """Deterministic parameter init replicating BaseModel.init_weights."""
    # nn.Linear: weight ~ Normal(0, initializer_range), bias = 0
    w = initializer_range * jax.random.normal(
        key, (hidden_in, hidden_out), dtype=jnp.float32)
    b = jnp.zeros((1, hidden_out), dtype=jnp.float32)
    # BertLayerNorm: weight = 1, bias = 0
    gamma = jnp.ones((1, hidden_out), dtype=jnp.float32)
    beta = jnp.zeros((1, hidden_out), dtype=jnp.float32)
    return w, b, gamma, beta


def _reference(x, w, b, gamma, beta):
    """Plain-JAX reference with the same bf16 operand quantization as the
    kernel (f32 accumulate, f32 LayerNorm stats, bf16 output)."""
    B, S, H_in = x.shape
    xq = x.reshape(-1, H_in).astype(jnp.bfloat16).astype(jnp.float32)
    wq = w.astype(jnp.bfloat16).astype(jnp.float32)
    h = xq @ wq + jnp.asarray(b, jnp.float32).reshape(1, -1)
    mu = h.mean(axis=-1, keepdims=True)
    var = ((h - mu) ** 2).mean(axis=-1, keepdims=True)
    y = ((h - mu) / jnp.sqrt(var + LAYER_NORM_EPS)
         * jnp.asarray(gamma, jnp.float32).reshape(1, -1)
         + jnp.asarray(beta, jnp.float32).reshape(1, -1))
    return y.astype(jnp.bfloat16).astype(jnp.float32).reshape(B, S, -1)


if __name__ == "__main__":
    batch, seq, hidden = 2, 16, 32
    key = jax.random.PRNGKey(0)
    k_x, k_w, k_x2, k_w2 = jax.random.split(key, 4)

    # --- Path 1: W fully VMEM-resident (single matmul per token tile). ---
    x = jax.random.normal(k_x, (batch, seq, hidden), dtype=jnp.float32)
    w, b, gamma, beta = init_weights(k_w, hidden, hidden, initializer_range=0.02)
    y = jax.block_until_ready(linear_layernorm(x, w, b, gamma, beta))
    assert y.dtype == jnp.bfloat16
    y_ref = _reference(x, w, b, gamma, beta)
    err = float(jnp.max(jnp.abs(y.astype(jnp.float32) - y_ref)))
    assert jnp.allclose(y.astype(jnp.float32), y_ref, atol=2e-2, rtol=2e-2), err

    # --- Path 2: K-tiled accumulator (forced via tk to exercise it small). ---
    hidden_in2 = 256
    x2 = jax.random.normal(k_x2, (batch, seq, hidden_in2), dtype=jnp.float32)
    w2, b2, g2, be2 = init_weights(k_w2, hidden_in2, hidden, initializer_range=0.02)
    y2 = jax.block_until_ready(linear_layernorm(x2, w2, b2, g2, be2, tk=128))
    y2_ref = _reference(x2, w2, b2, g2, be2)
    err2 = float(jnp.max(jnp.abs(y2.astype(jnp.float32) - y2_ref)))
    assert jnp.allclose(y2.astype(jnp.float32), y2_ref, atol=2e-2, rtol=2e-2), err2

    print("KERNEL_OK")
</pallas_src>

<mosaic_0001>
module attributes {stable_mosaic.version = 11 : i64} {
  func.func @kernel(%arg0: i32, %arg1: memref<16x128xf32, #tpu.memory_space<vmem>>, %arg2: memref<128x128xbf16, #tpu.memory_space<vmem>>, %arg3: memref<1x128xf32, #tpu.memory_space<vmem>>, %arg4: memref<1x128xf32, #tpu.memory_space<vmem>>, %arg5: memref<1x128xf32, #tpu.memory_space<vmem>>, %arg6: memref<16x128xbf16, #tpu.memory_space<vmem>>) attributes {dimension_semantics = [#tpu.dimension_semantics<parallel>], iteration_bounds = array<i64: 2>, scalar_prefetch = 0 : i64, scratch_operands = 0 : i64, tpu.core_type = #tpu.core_type<tc>, window_params = [{transform_indices = @transform_0, window_bounds = array<i64: 16, 128>}, {pipeline_mode = #tpu.pipeline_mode<synchronous>, transform_indices = @transform_1, window_bounds = array<i64: 128, 128>}, {pipeline_mode = #tpu.pipeline_mode<synchronous>, transform_indices = @transform_2, window_bounds = array<i64: 1, 128>}, {pipeline_mode = #tpu.pipeline_mode<synchronous>, transform_indices = @transform_3, window_bounds = array<i64: 1, 128>}, {pipeline_mode = #tpu.pipeline_mode<synchronous>, transform_indices = @transform_4, window_bounds = array<i64: 1, 128>}, {transform_indices = @transform_5, window_bounds = array<i64: 16, 128>}]} {
    %c0 = arith.constant 0 : index
    %c0_0 = arith.constant 0 : index
    %0 = vector.load %arg1[%c0, %c0_0] : memref<16x128xf32, #tpu.memory_space<vmem>>, vector<16x128xf32>
    %1 = arith.truncf %0 : vector<16x128xf32> to vector<16x128xbf16>
    %c0_1 = arith.constant 0 : index
    %c0_2 = arith.constant 0 : index
    %2 = vector.load %arg2[%c0_1, %c0_2] : memref<128x128xbf16, #tpu.memory_space<vmem>>, vector<128x128xbf16>
    %cst = arith.constant dense<0.000000e+00> : vector<16x128xf32>
    %3 = tpu.matmul %1, %2, %cst {dimension_numbers = #tpu.dot_dimension_numbers<[1], [0], [0], [1], [0, 0, 1, 1], [], []>} : vector<16x128xbf16>, vector<128x128xbf16>, vector<16x128xf32> -> vector<16x128xf32>
    %c0_3 = arith.constant 0 : index
    %c0_4 = arith.constant 0 : index
    %4 = vector.load %arg3[%c0_3, %c0_4] : memref<1x128xf32, #tpu.memory_space<vmem>>, vector<1x128xf32>
    %5 = vector.broadcast %4 : vector<1x128xf32> to vector<16x128xf32>
    %6 = arith.addf %3, %5 : vector<16x128xf32>
    %c0_5 = arith.constant 0 : index
    %c0_6 = arith.constant 0 : index
    %7 = vector.load %arg4[%c0_5, %c0_6] : memref<1x128xf32, #tpu.memory_space<vmem>>, vector<1x128xf32>
    %c0_7 = arith.constant 0 : index
    %c0_8 = arith.constant 0 : index
    %8 = vector.load %arg5[%c0_7, %c0_8] : memref<1x128xf32, #tpu.memory_space<vmem>>, vector<1x128xf32>
    %cst_9 = arith.constant dense<0.000000e+00> : vector<16xf32>
    %9 = vector.multi_reduction <add>, %6, %cst_9 [1] : vector<16x128xf32> to vector<16xf32>
    %10 = vector.shape_cast %9 : vector<16xf32> to vector<16x1xf32>
    %11 = arith.mulf %6, %6 : vector<16x128xf32>
    %cst_10 = arith.constant dense<0.000000e+00> : vector<16xf32>
    %12 = vector.multi_reduction <add>, %11, %cst_10 [1] : vector<16x128xf32> to vector<16xf32>
    %13 = vector.shape_cast %12 : vector<16xf32> to vector<16x1xf32>
    %cst_11 = arith.constant 3.125000e-02 : f32
    %14 = vector.broadcast %cst_11 : f32 to vector<16x1xf32>
    %15 = arith.mulf %10, %14 : vector<16x1xf32>
    %cst_12 = arith.constant 3.125000e-02 : f32
    %16 = vector.broadcast %cst_12 : f32 to vector<16x1xf32>
    %17 = arith.mulf %13, %16 : vector<16x1xf32>
    %18 = arith.mulf %15, %15 : vector<16x1xf32>
    %19 = arith.subf %17, %18 : vector<16x1xf32>
    %cst_13 = arith.constant 0.000000e+00 : f32
    %20 = vector.broadcast %cst_13 : f32 to vector<16x1xf32>
    %21 = arith.maximumf %19, %20 : vector<16x1xf32>
    %22 = vector.broadcast %15 : vector<16x1xf32> to vector<16x128xf32>
    %23 = arith.subf %6, %22 : vector<16x128xf32>
    %cst_14 = arith.constant 9.99999996E-13 : f32
    %24 = vector.broadcast %cst_14 : f32 to vector<16x1xf32>
    %25 = arith.addf %21, %24 : vector<16x1xf32>
    %26 = math.rsqrt %25 : vector<16x1xf32>
    %27 = vector.broadcast %26 : vector<16x1xf32> to vector<16x128xf32>
    %28 = arith.mulf %23, %27 : vector<16x128xf32>
    %29 = vector.broadcast %7 : vector<1x128xf32> to vector<16x128xf32>
    %30 = arith.mulf %28, %29 : vector<16x128xf32>
    %31 = vector.broadcast %8 : vector<1x128xf32> to vector<16x128xf32>
    %32 = arith.addf %30, %31 : vector<16x128xf32>
    %33 = arith.truncf %32 : vector<16x128xf32> to vector<16x128xbf16>
    %c0_15 = arith.constant 0 : index
    %c0_16 = arith.constant 0 : index
    %34 = vector.load %arg6[%c0_15, %c0_16] : memref<16x128xbf16, #tpu.memory_space<vmem>>, vector<16x128xbf16>
    tpu.vector_store %arg6[%c0_15, %c0_16], %33 {strides = array<i32>} : memref<16x128xbf16, #tpu.memory_space<vmem>>, vector<16x128xbf16>,
    return
  }
  func.func @transform_0(%arg0: i32) -> (i32, i32) {
    %c0_i32 = arith.constant 0 : i32
    %c0_i32_0 = arith.constant 0 : i32
    return %arg0, %c0_i32 : i32, i32
  }
  func.func @transform_1(%arg0: i32) -> (i32, i32) {
    %c0_i32 = arith.constant 0 : i32
    %c0_i32_0 = arith.constant 0 : i32
    %c0_i32_1 = arith.constant 0 : i32
    return %c0_i32, %c0_i32_0 : i32, i32
  }
  func.func @transform_2(%arg0: i32) -> (i32, i32) {
    %c0_i32 = arith.constant 0 : i32
    %c0_i32_0 = arith.constant 0 : i32
    %c0_i32_1 = arith.constant 0 : i32
    return %c0_i32, %c0_i32_0 : i32, i32
  }
  func.func @transform_3(%arg0: i32) -> (i32, i32) {
    %c0_i32 = arith.constant 0 : i32
    %c0_i32_0 = arith.constant 0 : i32
    %c0_i32_1 = arith.constant 0 : i32
    return %c0_i32, %c0_i32_0 : i32, i32
  }
  func.func @transform_4(%arg0: i32) -> (i32, i32) {
    %c0_i32 = arith.constant 0 : i32
    %c0_i32_0 = arith.constant 0 : i32
    %c0_i32_1 = arith.constant 0 : i32
    return %c0_i32, %c0_i32_0 : i32, i32
  }
  func.func @transform_5(%arg0: i32) -> (i32, i32) {
    %c0_i32 = arith.constant 0 : i32
    %c0_i32_0 = arith.constant 0 : i32
    return %arg0, %c0_i32 : i32, i32
  }
}

module attributes {stable_mosaic.version = 11 : i64} {
  func.func @kernel(%arg0: i32, %arg1: memref<16x128xf32, #tpu.memory_space<vmem>>, %arg2: memref<128x128xbf16, #tpu.memory_space<vmem>>, %arg3: memref<1x128xf32, #tpu.memory_space<vmem>>, %arg4: memref<1x128xf32, #tpu.memory_space<vmem>>, %arg5: memref<1x128xf32, #tpu.memory_space<vmem>>, %arg6: memref<16x128xbf16, #tpu.memory_space<vmem>>) attributes {dimension_semantics = [#tpu.dimension_semantics<parallel>], iteration_bounds = array<i64: 2>, scalar_prefetch = 0 : i64, scratch_operands = 0 : i64, tpu.core_type = #tpu.core_type<tc>, window_params = [{transform_indices = @transform_0, window_bounds = array<i64: 16, 128>}, {pipeline_mode = #tpu.pipeline_mode<synchronous>, transform_indices = @transform_1, window_bounds = array<i64: 128, 128>}, {pipeline_mode = #tpu.pipeline_mode<synchronous>, transform_indices = @transform_2, window_bounds = array<i64: 1, 128>}, {pipeline_mode = #tpu.pipeline_mode<synchronous>, transform_indices = @transform_3, window_bounds = array<i64: 1, 128>}, {pipeline_mode = #tpu.pipeline_mode<synchronous>, transform_indices = @transform_4, window_bounds = array<i64: 1, 128>}, {transform_indices = @transform_5, window_bounds = array<i64: 16, 128>}]} {
    %c0 = arith.constant 0 : index
    %c0_0 = arith.constant 0 : index
    %0 = vector.load %arg1[%c0, %c0_0] : memref<16x128xf32, #tpu.memory_space<vmem>>, vector<16x128xf32>
    %1 = arith.truncf %0 : vector<16x128xf32> to vector<16x128xbf16>
    %c0_1 = arith.constant 0 : index
    %c0_2 = arith.constant 0 : index
    %2 = vector.load %arg2[%c0_1, %c0_2] : memref<128x128xbf16, #tpu.memory_space<vmem>>, vector<128x128xbf16>
    %cst = arith.constant dense<0.000000e+00> : vector<16x128xf32>
    %3 = tpu.matmul %1, %2, %cst {dimension_numbers = #tpu.dot_dimension_numbers<[1], [0], [0], [1], [0, 0, 1, 1], [], []>} : vector<16x128xbf16>, vector<128x128xbf16>, vector<16x128xf32> -> vector<16x128xf32>
    %c0_3 = arith.constant 0 : index
    %c0_4 = arith.constant 0 : index
    %4 = vector.load %arg3[%c0_3, %c0_4] : memref<1x128xf32, #tpu.memory_space<vmem>>, vector<1x128xf32>
    %5 = vector.broadcast %4 : vector<1x128xf32> to vector<16x128xf32>
    %6 = arith.addf %3, %5 : vector<16x128xf32>
    %c0_5 = arith.constant 0 : index
    %c0_6 = arith.constant 0 : index
    %7 = vector.load %arg4[%c0_5, %c0_6] : memref<1x128xf32, #tpu.memory_space<vmem>>, vector<1x128xf32>
    %c0_7 = arith.constant 0 : index
    %c0_8 = arith.constant 0 : index
    %8 = vector.load %arg5[%c0_7, %c0_8] : memref<1x128xf32, #tpu.memory_space<vmem>>, vector<1x128xf32>
    %cst_9 = arith.constant dense<0.000000e+00> : vector<16xf32>
    %9 = vector.multi_reduction <add>, %6, %cst_9 [1] : vector<16x128xf32> to vector<16xf32>
    %10 = vector.shape_cast %9 : vector<16xf32> to vector<16x1xf32>
    %11 = arith.mulf %6, %6 : vector<16x128xf32>
    %cst_10 = arith.constant dense<0.000000e+00> : vector<16xf32>
    %12 = vector.multi_reduction <add>, %11, %cst_10 [1] : vector<16x128xf32> to vector<16xf32>
    %13 = vector.shape_cast %12 : vector<16xf32> to vector<16x1xf32>
    %cst_11 = arith.constant 3.125000e-02 : f32
    %14 = vector.broadcast %cst_11 : f32 to vector<16x1xf32>
    %15 = arith.mulf %10, %14 : vector<16x1xf32>
    %cst_12 = arith.constant 3.125000e-02 : f32
    %16 = vector.broadcast %cst_12 : f32 to vector<16x1xf32>
    %17 = arith.mulf %13, %16 : vector<16x1xf32>
    %18 = arith.mulf %15, %15 : vector<16x1xf32>
    %19 = arith.subf %17, %18 : vector<16x1xf32>
    %cst_13 = arith.constant 0.000000e+00 : f32
    %20 = vector.broadcast %cst_13 : f32 to vector<16x1xf32>
    %21 = arith.maximumf %19, %20 : vector<16x1xf32>
    %22 = vector.broadcast %15 : vector<16x1xf32> to vector<16x128xf32>
    %23 = arith.subf %6, %22 : vector<16x128xf32>
    %cst_14 = arith.constant 9.99999996E-13 : f32
    %24 = vector.broadcast %cst_14 : f32 to vector<16x1xf32>
    %25 = arith.addf %21, %24 : vector<16x1xf32>
    %26 = math.rsqrt %25 : vector<16x1xf32>
    %27 = vector.broadcast %26 : vector<16x1xf32> to vector<16x128xf32>
    %28 = arith.mulf %23, %27 : vector<16x128xf32>
    %29 = vector.broadcast %7 : vector<1x128xf32> to vector<16x128xf32>
    %30 = arith.mulf %28, %29 : vector<16x128xf32>
    %31 = vector.broadcast %8 : vector<1x128xf32> to vector<16x128xf32>
    %32 = arith.addf %30, %31 : vector<16x128xf32>
    %33 = arith.truncf %32 : vector<16x128xf32> to vector<16x128xbf16>
    %c0_15 = arith.constant 0 : index
    %c0_16 = arith.constant 0 : index
    %34 = vector.load %arg6[%c0_15, %c0_16] : memref<16x128xbf16, #tpu.memory_space<vmem>>, vector<16x128xbf16>
    tpu.vector_store %arg6[%c0_15, %c0_16], %33 {strides = array<i32>} : memref<16x128xbf16, #tpu.memory_space<vmem>>, vector<16x128xbf16>,
    return
  }
  func.func @transform_0(%arg0: i32) -> (i32, i32) {
    %c0_i32 = arith.constant 0 : i32
    %c0_i32_0 = arith.constant 0 : i32
    return %arg0, %c0_i32 : i32, i32
  }
  func.func @transform_1(%arg0: i32) -> (i32, i32) {
    %c0_i32 = arith.constant 0 : i32
    %c0_i32_0 = arith.constant 0 : i32
    %c0_i32_1 = arith.constant 0 : i32
    return %c0_i32, %c0_i32_0 : i32, i32
  }
  func.func @transform_2(%arg0: i32) -> (i32, i32) {
    %c0_i32 = arith.constant 0 : i32
    %c0_i32_0 = arith.constant 0 : i32
    %c0_i32_1 = arith.constant 0 : i32
    return %c0_i32, %c0_i32_0 : i32, i32
  }
  func.func @transform_3(%arg0: i32) -> (i32, i32) {
    %c0_i32 = arith.constant 0 : i32
    %c0_i32_0 = arith.constant 0 : i32
    %c0_i32_1 = arith.constant 0 : i32
    return %c0_i32, %c0_i32_0 : i32, i32
  }
  func.func @transform_4(%arg0: i32) -> (i32, i32) {
    %c0_i32 = arith.constant 0 : i32
    %c0_i32_0 = arith.constant 0 : i32
    %c0_i32_1 = arith.constant 0 : i32
    return %c0_i32, %c0_i32_0 : i32, i32
  }
  func.func @transform_5(%arg0: i32) -> (i32, i32) {
    %c0_i32 = arith.constant 0 : i32
    %c0_i32_0 = arith.constant 0 : i32
    return %arg0, %c0_i32 : i32, i32
  }
}

</mosaic_0001>

<llo_original>
// kernel: tpu_custom_call.1
$region0: #{tpu_custom_call.1}
  #allocation0 [shape = 'u32[]', space=smem, size = 0x4, offset = 0x4, fixed_abs, tag = 'smem constant byte address 0x4 - core index']
  #allocation1 [shape = 'u32[144,128]{1,0:T(1,128)}', space=vmem, size = 0x12000, scoped, tag = 'internal scratch']
  %s0 = inlined_call_operand.hbm [shape: f32[32,128], index: 0, kind: input, shape index: {}]
  %s1 = inlined_call_operand.hbm [shape: bf16[128,128], index: 1, kind: input, shape index: {}]
  %s2 = inlined_call_operand.vmem [shape: f32[1,128], index: 2, kind: input, shape index: {}]
  %s3 = inlined_call_operand.vmem [shape: f32[1,128], index: 3, kind: input, shape index: {}]
  %s4 = inlined_call_operand.vmem [shape: f32[1,128], index: 4, kind: input, shape index: {}]
  %s5 = inlined_call_operand.hbm [shape: bf16[32,128], index: 5, kind: output, shape index: {}]
  %s6 = sld [smem:[#allocation0]]
  $region61: #{tpu_custom_call.1} parent=0
    _
  %s8 = ssub.s32 1, %s6
  %s9 = scalar_select 0, %s8, %s6
  $region1: #{tpu_custom_call.1} parent=0
    #allocation2 [shape = 'u8[16384]{0}', space=vmem, size = 0x4000, scoped, tag = 'input window, operand 0']
    #allocation3 [shape = 's32[2]{0}', space=sflag, size = 0x8, scoped, tag = 'scoped memory for tpu_custom_call.1']
    #allocation4 [shape = 's32[2]{0}', space=sflag, size = 0x8, scoped, tag = 'scoped memory for tpu_custom_call.1']
    #allocation5 [shape = 'u8[32768]{0}', space=vmem, size = 0x8000, scoped, tag = 'input window, operand 1, single buffered']
    #allocation6 [shape = 's32[1]{0}', space=sflag, size = 0x4, scoped, tag = 'scoped memory for tpu_custom_call.1']
    #allocation7 [shape = 'u8[8192]{0}', space=vmem, size = 0x2000, scoped, tag = 'output window, operand 0']
    %10 = vsyncpa [#allocation3], 0
    %s11 = scalar_lea.sflag [#allocation3], 1
    %12 = vsyncpa %s11, 0
    %13 = vsyncpa [#allocation6], 0
    %14 = vsyncpa [#allocation4], 0
    %s15 = scalar_lea.sflag [#allocation4], 1
    %16 = vsyncpa %s15, 0
    loop: start=0, step=1, limit=4
    $region2: #{tpu_custom_call.1} parent=1 // loop_pre_header
      _
    $region3: #{tpu_custom_call.1} parent=1 // loop_header
      %s18 = sphi 0, %s22
      %p19 = scmp.ge.s32.totalorder %s18, 4
      %s28 = sphi 0, %s30
      %s31 = sphi 0, %s28
      %s32 = sphi 0, %s31
      %s48 = sphi 0, %s32
      %s52 = sphi 0, %s52
      %s54 = sphi 0, %s52
      %s55 = sphi 0, %s54
      %s69 = sphi 0, %s55
      %s73 = sphi 0, %s73
      %s75 = sphi 0, %s73
      %s76 = sphi 0, %s75
      %s90 = sphi 0, %s76
      %s94 = sphi 0, %s94
      %s96 = sphi 0, %s94
      %s97 = sphi 0, %s96
      %s111 = sphi 0, %s97
      %s115 = sphi 0, %s115
      %s117 = sphi 0, %s115
      %s118 = sphi 0, %s117
      %s132 = sphi 0, %s118
      %s138 = sphi 0, %s140
      %s141 = sphi 0, %s138
      %s142 = sphi 0, %s141
      %s158 = sphi 0, %s142
    $region4: #{tpu_custom_call.1} parent=1 // loop_header_branch
      %21 = sbr.rel (%p19) target = $region8
    $region5: #{tpu_custom_call.1} parent=1 // loop_body
      %s23 = ssub.s32 %s18, 1
      %s24 = ssub.s32 %s18, 2
      %s25 = sadd.s32 %s18, 1
      %s26 = ssub.s32 %s18, %s25
      %p27 = scmp.eq.s32.totalorder %s26, 0
      %s29 = sadd.s32 %s28, 1
      %s30 = scalar_select %p27, %s28, %s29
      %p33 = pneg %p27
      %p34 = scmp.eq.s32.totalorder %s18, 1
      %p35 = por %p33, %p34
      %p36 = scmp.ne.s32.totalorder %s28, %s31
      %p37 = scmp.eq.s32.totalorder %s18, 0
      %p38 = por %p36, %p37
      %p39 = scmp.ne.s32.totalorder %s28, %s31
      %p40 = scmp.eq.s32.totalorder %s23, 1
      %p41 = por %p39, %p40
      %p42 = scmp.ne.s32.totalorder %s31, %s32
      %p43 = scmp.eq.s32.totalorder %s23, 0
      %p44 = por %p42, %p43
      %p45 = scmp.ne.s32.totalorder %s31, %s32
      %p46 = scmp.eq.s32.totalorder %s24, 1
      %p47 = por %p45, %p46
      %p49 = scmp.ne.s32.totalorder %s32, %s48
      %p50 = scmp.eq.s32.totalorder %s24, 0
      %p51 = por %p49, %p50
      %s53 = sadd.s32 %s52, 1
      %p56 = scmp.eq.s32.totalorder %s18, 1
      %p57 = scmp.ne.s32.totalorder %s52, %s54
      %p58 = scmp.eq.s32.totalorder %s18, 0
      %p59 = por %p57, %p58
      %p60 = scmp.ne.s32.totalorder %s52, %s54
      %p61 = scmp.eq.s32.totalorder %s23, 1
      %p62 = por %p60, %p61
      %p63 = scmp.ne.s32.totalorder %s54, %s55
      %p64 = scmp.eq.s32.totalorder %s23, 0
      %p65 = por %p63, %p64
      %p66 = scmp.ne.s32.totalorder %s54, %s55
      %p67 = scmp.eq.s32.totalorder %s24, 1
      %p68 = por %p66, %p67
      %p70 = scmp.ne.s32.totalorder %s55, %s69
      %p71 = scmp.eq.s32.totalorder %s24, 0
      %p72 = por %p70, %p71
      %s74 = sadd.s32 %s73, 1
      %p77 = scmp.eq.s32.totalorder %s18, 1
      %p78 = scmp.ne.s32.totalorder %s73, %s75
      %p79 = scmp.eq.s32.totalorder %s18, 0
      %p80 = por %p78, %p79
      %p81 = scmp.ne.s32.totalorder %s73, %s75
      %p82 = scmp.eq.s32.totalorder %s23, 1
      %p83 = por %p81, %p82
      %p84 = scmp.ne.s32.totalorder %s75, %s76
      %p85 = scmp.eq.s32.totalorder %s23, 0
      %p86 = por %p84, %p85
      %p87 = scmp.ne.s32.totalorder %s75, %s76
      %p88 = scmp.eq.s32.totalorder %s24, 1
      %p89 = por %p87, %p88
      %p91 = scmp.ne.s32.totalorder %s76, %s90
      %p92 = scmp.eq.s32.totalorder %s24, 0
      %p93 = por %p91, %p92
      %s95 = sadd.s32 %s94, 1
      %p98 = scmp.eq.s32.totalorder %s18, 1
      %p99 = scmp.ne.s32.totalorder %s94, %s96
      %p100 = scmp.eq.s32.totalorder %s18, 0
      %p101 = por %p99, %p100
      %p102 = scmp.ne.s32.totalorder %s94, %s96
      %p103 = scmp.eq.s32.totalorder %s23, 1
      %p104 = por %p102, %p103
      %p105 = scmp.ne.s32.totalorder %s96, %s97
      %p106 = scmp.eq.s32.totalorder %s23, 0
      %p107 = por %p105, %p106
      %p108 = scmp.ne.s32.totalorder %s96, %s97
      %p109 = scmp.eq.s32.totalorder %s24, 1
      %p110 = por %p108, %p109
      %p112 = scmp.ne.s32.totalorder %s97, %s111
      %p113 = scmp.eq.s32.totalorder %s24, 0
      %p114 = por %p112, %p113
      %s116 = sadd.s32 %s115, 1
      %p119 = scmp.eq.s32.totalorder %s18, 1
      %p120 = scmp.ne.s32.totalorder %s115, %s117
      %p121 = scmp.eq.s32.totalorder %s18, 0
      %p122 = por %p120, %p121
      %p123 = scmp.ne.s32.totalorder %s115, %s117
      %p124 = scmp.eq.s32.totalorder %s23, 1
      %p125 = por %p123, %p124
      %p126 = scmp.ne.s32.totalorder %s117, %s118
      %p127 = scmp.eq.s32.totalorder %s23, 0
      %p128 = por %p126, %p127
      %p129 = scmp.ne.s32.totalorder %s117, %s118
      %p130 = scmp.eq.s32.totalorder %s24, 1
      %p131 = por %p129, %p130
      %p133 = scmp.ne.s32.totalorder %s118, %s132
      %p134 = scmp.eq.s32.totalorder %s24, 0
      %p135 = por %p133, %p134
      %s136 = ssub.s32 %s18, %s25
      %p137 = scmp.eq.s32.totalorder %s136, 0
      %s139 = sadd.s32 %s138, 1
      %s140 = scalar_select %p137, %s138, %s139
      %p143 = pneg %p137
      %p144 = scmp.eq.s32.totalorder %s18, 1
      %p145 = por %p143, %p144
      %p146 = scmp.ne.s32.totalorder %s138, %s141
      %p147 = scmp.eq.s32.totalorder %s18, 0
      %p148 = por %p146, %p147
      %p149 = scmp.ne.s32.totalorder %s138, %s141
      %p150 = scmp.eq.s32.totalorder %s23, 1
      %p151 = por %p149, %p150
      %p152 = scmp.ne.s32.totalorder %s141, %s142
      %p153 = scmp.eq.s32.totalorder %s23, 0
      %p154 = por %p152, %p153
      %p155 = scmp.ne.s32.totalorder %s141, %s142
      %p156 = scmp.eq.s32.totalorder %s24, 1
      %p157 = por %p155, %p156
      %p159 = scmp.ne.s32.totalorder %s142, %s158
      %p160 = scmp.eq.s32.totalorder %s24, 0
      %p161 = por %p159, %p160
      %p162 = scmp.le.s32.totalorder 1, %s18
      %p163 = scmp.lt.s32.totalorder %s18, 3
      %p164 = pnand %p162, %p163
      %p165 = pneg %p164
      // Predicated region
      $region9: #{tpu_custom_call.1} parent=5 // pred_check
        _
      $region10: #{tpu_custom_call.1} parent=5 // pred_check_branch
        %167 = sbr.rel (%p164) target = $region12
      $region11: #{tpu_custom_call.1} parent=5 // pred_region
        %s168 = ssub.s32 %s18, 1
        // Predicated region
        $region13: #{tpu_custom_call.1} parent=11 // pred_check
          %p169 = pneg %p65
        $region14: #{tpu_custom_call.1} parent=11 // pred_check_branch
          %171 = sbr.rel (%p169) target = $region16
        $region15: #{tpu_custom_call.1} parent=11 // pred_region
          %s173 = ssub.s32 1024, 1024
          %174 = vsyncadd [#allocation6], %s173
          %s175 = sshll.u32 [#allocation5], 4
          %s176 = int_to_ptr.vmem [resolvable:$true] %s175
          %181 = dma.hbm_to_vmem [thread:$0]  %s1, 1024, %s176, [#allocation6], 64, 64, 4
        $region16: #{tpu_custom_call.1} parent=11 // pred_fallthru
          _
        // Predicated region
        $region17: #{tpu_custom_call.1} parent=11 // pred_check
          %p182 = pneg %p86
        $region18: #{tpu_custom_call.1} parent=11 // pred_check_branch
          %184 = sbr.rel (%p182) target = $region20
        $region19: #{tpu_custom_call.1} parent=11 // pred_region
          _
        $region20: #{tpu_custom_call.1} parent=11 // pred_fallthru
          _
        // Predicated region
        $region21: #{tpu_custom_call.1} parent=11 // pred_check
          %p185 = pneg %p107
        $region22: #{tpu_custom_call.1} parent=11 // pred_check_branch
          %187 = sbr.rel (%p185) target = $region24
        $region23: #{tpu_custom_call.1} parent=11 // pred_region
          _
        $region24: #{tpu_custom_call.1} parent=11 // pred_fallthru
          _
        // Predicated region
        $region25: #{tpu_custom_call.1} parent=11 // pred_check
          %p188 = pneg %p128
        $region26: #{tpu_custom_call.1} parent=11 // pred_check_branch
          %190 = sbr.rel (%p188) target = $region28
        $region27: #{tpu_custom_call.1} parent=11 // pred_region
          _
        $region28: #{tpu_custom_call.1} parent=11 // pred_fallthru
          _
      $region12: #{tpu_custom_call.1} parent=5 // pred_fallthru
        _
      %p191 = scmp.lt.s32.totalorder %s18, 2
      // Predicated region
      $region29: #{tpu_custom_call.1} parent=5 // pred_check
        %p192 = pneg %p191
      $region30: #{tpu_custom_call.1} parent=5 // pred_check_branch
        %194 = sbr.rel (%p192) target = $region32
      $region31: #{tpu_custom_call.1} parent=5 // pred_region
        // Predicated region
        $region33: #{tpu_custom_call.1} parent=31 // pred_check
          %p195 = pneg %p38
        $region34: #{tpu_custom_call.1} parent=31 // pred_check_branch
          %197 = sbr.rel (%p195) target = $region36
        $region35: #{tpu_custom_call.1} parent=31 // pred_region
          %s198 = sand.u32 %s28, 1
          %s199 = scalar_lea.sflag [#allocation3], %s198
          %s200 = sand.u32 %s28, 1
          %s201 = smul.addr %s200, 16
          %s202 = scalar_lea.vmem [#allocation2], %s201
          %s203 = smul.u32 2, %s18
          %s205 = ssub.s32 256, 256
          %206 = vsyncadd %s199, %s205
          %s207 = smul.addr %s203, 128
          %s208 = scalar_lea.hbm %s0, %s207
          %s209 = sshll.u32 %s202, 4
          %s210 = int_to_ptr.vmem [resolvable:$true] %s209
          %215 = dma.hbm_to_vmem [thread:$0]  %s208, 256, %s210, %s199, 128, 128, 8
        $region36: #{tpu_custom_call.1} parent=31 // pred_fallthru
          _
      $region32: #{tpu_custom_call.1} parent=5 // pred_fallthru
        _
      %p216 = scmp.le.s32.totalorder 1, %s18
      %p217 = scmp.lt.s32.totalorder %s18, 3
      %p218 = pnand %p216, %p217
      %p219 = pneg %p218
      // Predicated region
      $region37: #{tpu_custom_call.1} parent=5 // pred_check
        _
      $region38: #{tpu_custom_call.1} parent=5 // pred_check_branch
        %221 = sbr.rel (%p218) target = $region40
      $region39: #{tpu_custom_call.1} parent=5 // pred_region
        %s222 = ssub.s32 %s18, 1
        %s223 = sand.u32 %s31, 1
        %s224 = scalar_lea.sflag [#allocation3], %s223
        %s225 = sand.u32 %s31, 1
        %s226 = smul.addr %s225, 16
        %s227 = scalar_lea.vmem [#allocation2], %s226
        // Predicated region
        $region41: #{tpu_custom_call.1} parent=39 // pred_check
          %p228 = pneg %p44
        $region42: #{tpu_custom_call.1} parent=39 // pred_check_branch
          %230 = sbr.rel (%p228) target = $region44
        $region43: #{tpu_custom_call.1} parent=39 // pred_region
          %231 = dma.done %s224, 256
        $region44: #{tpu_custom_call.1} parent=39 // pred_fallthru
          _
        // Predicated region
        $region45: #{tpu_custom_call.1} parent=39 // pred_check
          %p232 = pneg %p65
        $region46: #{tpu_custom_call.1} parent=39 // pred_check_branch
          %234 = sbr.rel (%p232) target = $region48
        $region47: #{tpu_custom_call.1} parent=39 // pred_region
          %235 = dma.done [#allocation6], 1024
        $region48: #{tpu_custom_call.1} parent=39 // pred_fallthru
          _
        %s236 = sand.u32 %s31, 1
        %s237 = scalar_lea.sflag [#allocation3], %s236
        %s238 = sand.u32 %s31, 1
        %s239 = smul.addr %s238, 16
        %s240 = scalar_lea.vmem [#allocation2], %s239
        %p241 = pneg %p44
        %p242 = pneg %p41
        %p243 = pneg %p65
        %p244 = pneg %p62
        %p245 = pneg %p86
        %p246 = pneg %p83
        %p247 = pneg %p107
        %p248 = pneg %p104
        %p249 = pneg %p128
        %p250 = pneg %p125
        %p251 = pneg %p154
        %p252 = pneg %p151
        %s253 = sand.u32 %s141, 1
        %s254 = scalar_lea.sflag [#allocation4], %s253
        %s255 = sand.u32 %s141, 1
        %s256 = smul.addr %s255, 8
        %s257 = scalar_lea.vmem [#allocation7], %s256
        %s258 = smul.u32 2, %s23
        %s259 = smul.u32 2, %s23
        %v261 = vld [vmem:[%s227] sm:$0xff]
        %v262 = vld [vmem:[%s227 + $0x8] sm:$0xff]
        %v263 = vpack.c.bf16 %v262, %v261
        %v264 = vld [vmem:[#allocation5] sm:$0xf]
        %v265 = vld [vmem:[#allocation5 + $0x4] sm:$0xf]
        %v266 = vld [vmem:[#allocation5 + $0x8] sm:$0xf]
        %v267 = vld [vmem:[#allocation5 + $0xc] sm:$0xf]
        %v268 = vld [vmem:[#allocation5 + $0x10] sm:$0xf]
        %v269 = vld [vmem:[#allocation5 + $0x14] sm:$0xf]
        %v270 = vld [vmem:[#allocation5 + $0x18] sm:$0xf]
        %v271 = vld [vmem:[#allocation5 + $0x1c] sm:$0xf]
        %v272 = vld [vmem:[#allocation5 + $0x20] sm:$0xf]
        %v273 = vld [vmem:[#allocation5 + $0x24] sm:$0xf]
        %v274 = vld [vmem:[#allocation5 + $0x28] sm:$0xf]
        %v275 = vld [vmem:[#allocation5 + $0x2c] sm:$0xf]
        %v276 = vld [vmem:[#allocation5 + $0x30] sm:$0xf]
        %v277 = vld [vmem:[#allocation5 + $0x34] sm:$0xf]
        %v278 = vld [vmem:[#allocation5 + $0x38] sm:$0xf]
        %v279 = vld [vmem:[#allocation5 + $0x3c] sm:$0xf]
        %v280 = vld [vmem:[%s2] sm:$0x1]
        %v282 = vlaneseq
        %v283 = vshrl.u32 %v282, 7
        %v284 = vsub.s32 0, %v283
        %v285 = vrot.slane %v280, %v284
        %v303 = vunpack.c.l.b16 %v264
        %v304 = vunpack.c.l.b16 %v265
        %v305 = vunpack.c.l.b16 %v266
        %v306 = vunpack.c.l.b16 %v267
        %v307 = vunpack.c.l.b16 %v268
        %v308 = vunpack.c.l.b16 %v269
        %v309 = vunpack.c.l.b16 %v270
        %v310 = vunpack.c.l.b16 %v271
        %v311 = vunpack.c.l.b16 %v272
        %v312 = vunpack.c.l.b16 %v273
        %v313 = vunpack.c.l.b16 %v274
        %v314 = vunpack.c.l.b16 %v275
        %v315 = vunpack.c.l.b16 %v276
        %v316 = vunpack.c.l.b16 %v277
        %v317 = vunpack.c.l.b16 %v278
        %v318 = vunpack.c.l.b16 %v279
        %v319 = vpack.c.b16 %v304, %v303
        %v320 = vpack.c.b16 %v306, %v305
        %v321 = vpack.c.b16 %v308, %v307
        %v322 = vpack.c.b16 %v310, %v309
        %v323 = vpack.c.b16 %v312, %v311
        %v324 = vpack.c.b16 %v314, %v313
        %v325 = vpack.c.b16 %v316, %v315
        %v326 = vpack.c.b16 %v318, %v317
        %335 = vmatprep.subr.bf16.mxu0 0
        %336 = vmatpush1.bf16.msra.mxu0 %v319
        %337 = vmatprep.subr.bf16.mxu0 0
        %338 = vmatpush1.bf16.msra.mxu0 %v320
        %339 = vmatprep.subr.bf16.mxu0 0
        %340 = vmatpush1.bf16.msra.mxu0 %v321
        %341 = vmatprep.subr.bf16.mxu0 0
        %342 = vmatpush1.bf16.msra.mxu0 %v322
        %343 = vmatprep.subr.bf16.mxu0 0
        %344 = vmatpush1.bf16.msra.mxu0 %v323
        %345 = vmatprep.subr.bf16.mxu0 0
        %346 = vmatpush1.bf16.msra.mxu0 %v324
        %347 = vmatprep.subr.bf16.mxu0 0
        %348 = vmatpush1.bf16.msra.mxu0 %v325
        %349 = vmatprep.subr.bf16.mxu0 0
        %350 = vmatpush1.bf16.msra.mxu0 %v326
        %351 = vmatprep.subr.bf16.mxu0 0
        %352 = vmatpush1.bf16.msra.mxu0 0
        %353 = vmatprep.subr.bf16.mxu0 0
        %354 = vmatpush1.bf16.msra.mxu0 0
        %355 = vmatprep.subr.bf16.mxu0 0
        %356 = vmatpush1.bf16.msra.mxu0 0
        %357 = vmatprep.subr.bf16.mxu0 0
        %358 = vmatpush1.bf16.msra.mxu0 0
        %359 = vmatprep.subr.bf16.mxu0 0
        %360 = vmatpush1.bf16.msra.mxu0 0
        %361 = vmatprep.subr.bf16.mxu0 0
        %362 = vmatpush1.bf16.msra.mxu0 0
        %363 = vmatprep.subr.bf16.mxu0 0
        %364 = vmatpush1.bf16.msra.mxu0 0
        %365 = vmatprep.subr.bf16.mxu0 0
        %366 = vmatpush1.bf16.msra.mxu0 0
        %367 = vmatprep.mubr.bf16.mxu0 0
        %368 = vmatmul.mubr.bf16.gmra.mrb[0].mxu0 %v263
        %v369 = vpop.f32.mrb[0].mxu0
        %v370 = vadd.f32 %v285, %v369
        %v371 = vpop.f32.mrb[0].mxu0
        %v372 = vpop.f32.mrb[0].mxu0
        %v373 = vadd.f32 %v285, %v372
        %v374 = vpop.f32.mrb[0].mxu0
        %375 = vdwg.mxu0
        %v376 = vld [vmem:[%s3] sm:$0x1]
        %v377 = vld [vmem:[%s4] sm:$0x1]
        %378 = vadd.xlane.f32.xlu0 %v370
        %v379 = vpop.xlane.xlu0 %378
        %380 = vadd.xlane.f32.xlu0 %v373
        %v381 = vpop.xlane.xlu0 %380
        %v382 = vmul.f32 %v370, %v370
        %v383 = vmul.f32 %v373, %v373
        %384 = vadd.xlane.f32.xlu0 %v382
        %v385 = vpop.xlane.xlu0 %384
        %386 = vadd.xlane.f32.xlu0 %v383
        %v387 = vpop.xlane.xlu0 %386
        %v388 = vmul.f32 %v379, 0.03125
        %v389 = vmul.f32 %v381, 0.03125
        %v390 = vmul.f32 %v385, 0.03125
        %v391 = vmul.f32 %v387, 0.03125
        %v392 = vmul.f32 %v388, %v388
        %v393 = vmul.f32 %v389, %v389
        %v394 = vsub.f32 %v390, %v392
        %v395 = vsub.f32 %v391, %v393
        %v396 = vmax.f32 %v394, 0.0
        %v397 = vmax.f32 %v395, 0.0
        %v398 = vsub.f32 %v370, %v388
        %v399 = vsub.f32 %v373, %v389
        %v400 = vadd.f32 %v396, 1e-12
        %v401 = vadd.f32 %v397, 1e-12
        %v402 = vrsqrt.pop %v400
        %v403 = vrsqrt.pop %v401
        %v404 = vmul.f32 %v398, %v402
        %v405 = vmul.f32 %v399, %v403
        %v407 = vlaneseq
        %v408 = vshrl.u32 %v407, 7
        %v409 = vsub.s32 0, %v408
        %v410 = vrot.slane %v376, %v409
        %v412 = vmul.f32 %v404, %v410
        %v413 = vmul.f32 %v405, %v410
        %v415 = vlaneseq
        %v416 = vshrl.u32 %v415, 7
        %v417 = vsub.s32 0, %v416
        %v418 = vrot.slane %v377, %v417
        %v420 = vadd.f32 %v412, %v418
        %v421 = vadd.f32 %v413, %v418
        %v422 = vpack.c.bf16 %v421, %v420
        %v424 = vunpack.c.l.b16 %v422
        %v425 = vunpack.c.h.b16 %v422
        %v426 = vpack.c.b16 %v424, %v424
        %v427 = vpack.c.b16 %v425, %v425
        %430 = vst [vmem:[%s257] sm:$0xf] %v426
        %431 = vst [vmem:[%s257 + $0x4] sm:$0xf] %v427
        %s432 = sand.u32 %s141, 1
        %s433 = scalar_lea.sflag [#allocation4], %s432
        %s434 = sand.u32 %s141, 1
        %s435 = smul.addr %s434, 8
        %s436 = scalar_lea.vmem [#allocation7], %s435
        // Predicated region
        $region49: #{tpu_custom_call.1} parent=39 // pred_check
          %p437 = pneg %p151
        $region50: #{tpu_custom_call.1} parent=39 // pred_check_branch
          %439 = sbr.rel (%p437) target = $region52
        $region51: #{tpu_custom_call.1} parent=39 // pred_region
          %s440 = smul.u32 2, %s23
          %s442 = ssub.s32 128, 128
          %443 = vsyncadd %s433, %s442
          %s444 = smul.addr %s440, 64
          %s445 = scalar_lea.hbm %s5, %s444
          %s446 = sshll.u32 %s436, 4
          %s447 = int_to_ptr.vmem [resolvable:$true] %s446
          %452 = dma.vmem_to_hbm [thread:$0]  %s447, 128, %s445, %s433, 64, 64, 4
        $region52: #{tpu_custom_call.1} parent=39 // pred_fallthru
          _
      $region40: #{tpu_custom_call.1} parent=5 // pred_fallthru
        _
      %p453 = scmp.le.s32.totalorder 2, %s18
      // Predicated region
      $region53: #{tpu_custom_call.1} parent=5 // pred_check
        %p454 = pneg %p453
      $region54: #{tpu_custom_call.1} parent=5 // pred_check_branch
        %456 = sbr.rel (%p454) target = $region56
      $region55: #{tpu_custom_call.1} parent=5 // pred_region
        %s457 = ssub.s32 %s18, 2
        // Predicated region
        $region57: #{tpu_custom_call.1} parent=55 // pred_check
          %p458 = pneg %p157
        $region58: #{tpu_custom_call.1} parent=55 // pred_check_branch
          %460 = sbr.rel (%p458) target = $region60
        $region59: #{tpu_custom_call.1} parent=55 // pred_region
          %s461 = sand.u32 %s142, 1
          %s462 = scalar_lea.sflag [#allocation4], %s461
          %s463 = sand.u32 %s142, 1
          %s464 = smul.addr %s463, 8
          %s465 = scalar_lea.vmem [#allocation7], %s464
          %466 = dma.done %s462, 128
        $region60: #{tpu_custom_call.1} parent=55 // pred_fallthru
          _
      $region56: #{tpu_custom_call.1} parent=5 // pred_fallthru
        _
    $region6: #{tpu_custom_call.1} parent=1 // loop_footer
      %s22 = sadd.s32 1, %s18
    $region7: #{tpu_custom_call.1} parent=1 // loop_footer_branch
      %17 = sbr.rel target = $region3
    $region8: #{tpu_custom_call.1} parent=1 // loop_exit
      _
    %467 = vsyncpa [#allocation3], 1
    %s468 = scalar_lea.sflag [#allocation3], 1
    %469 = vsyncpa %s468, 1
    %470 = vsyncpa [#allocation6], 1
    %471 = vsyncpa [#allocation4], 1
    %s472 = scalar_lea.sflag [#allocation4], 1
    %473 = vsyncpa %s472, 1

// kernel: tpu_custom_call.1
$region0: #{tpu_custom_call.1}
  #allocation0 [shape = 'u32[]', space=smem, size = 0x4, offset = 0x4, fixed_abs, tag = 'smem constant byte address 0x4 - core index']
  #allocation1 [shape = 'u32[144,128]{1,0:T(1,128)}', space=vmem, size = 0x12000, scoped, tag = 'internal scratch']
  %s0 = inlined_call_operand.hbm [shape: f32[32,128], index: 0, kind: input, shape index: {}]
  %s1 = inlined_call_operand.hbm [shape: bf16[128,128], index: 1, kind: input, shape index: {}]
  %s2 = inlined_call_operand.vmem [shape: f32[1,128], index: 2, kind: input, shape index: {}]
  %s3 = inlined_call_operand.vmem [shape: f32[1,128], index: 3, kind: input, shape index: {}]
  %s4 = inlined_call_operand.vmem [shape: f32[1,128], index: 4, kind: input, shape index: {}]
  %s5 = inlined_call_operand.hbm [shape: bf16[32,128], index: 5, kind: output, shape index: {}]
  %s6 = sld [smem:[#allocation0]]
  $region61: #{tpu_custom_call.1} parent=0
    _
  %s8 = ssub.s32 1, %s6
  %s9 = scalar_select 0, %s8, %s6
  $region1: #{tpu_custom_call.1} parent=0
    #allocation2 [shape = 'u8[16384]{0}', space=vmem, size = 0x4000, scoped, tag = 'input window, operand 0']
    #allocation3 [shape = 's32[2]{0}', space=sflag, size = 0x8, scoped, tag = 'scoped memory for tpu_custom_call.1']
    #allocation4 [shape = 's32[2]{0}', space=sflag, size = 0x8, scoped, tag = 'scoped memory for tpu_custom_call.1']
    #allocation5 [shape = 'u8[32768]{0}', space=vmem, size = 0x8000, scoped, tag = 'input window, operand 1, single buffered']
    #allocation6 [shape = 's32[1]{0}', space=sflag, size = 0x4, scoped, tag = 'scoped memory for tpu_custom_call.1']
    #allocation7 [shape = 'u8[8192]{0}', space=vmem, size = 0x2000, scoped, tag = 'output window, operand 0']
    %10 = vsyncpa [#allocation3], 0
    %s11 = scalar_lea.sflag [#allocation3], 1
    %12 = vsyncpa %s11, 0
    %13 = vsyncpa [#allocation6], 0
    %14 = vsyncpa [#allocation4], 0
    %s15 = scalar_lea.sflag [#allocation4], 1
    %16 = vsyncpa %s15, 0
    loop: start=0, step=1, limit=4
    $region2: #{tpu_custom_call.1} parent=1 // loop_pre_header
      _
    $region3: #{tpu_custom_call.1} parent=1 // loop_header
      %s18 = sphi 0, %s22
      %p19 = scmp.ge.s32.totalorder %s18, 4
      %s28 = sphi 0, %s30
      %s31 = sphi 0, %s28
      %s32 = sphi 0, %s31
      %s48 = sphi 0, %s32
      %s52 = sphi 0, %s52
      %s54 = sphi 0, %s52
      %s55 = sphi 0, %s54
      %s69 = sphi 0, %s55
      %s73 = sphi 0, %s73
      %s75 = sphi 0, %s73
      %s76 = sphi 0, %s75
      %s90 = sphi 0, %s76
      %s94 = sphi 0, %s94
      %s96 = sphi 0, %s94
      %s97 = sphi 0, %s96
      %s111 = sphi 0, %s97
      %s115 = sphi 0, %s115
      %s117 = sphi 0, %s115
      %s118 = sphi 0, %s117
      %s132 = sphi 0, %s118
      %s138 = sphi 0, %s140
      %s141 = sphi 0, %s138
      %s142 = sphi 0, %s141
      %s158 = sphi 0, %s142
    $region4: #{tpu_custom_call.1} parent=1 // loop_header_branch
      %21 = sbr.rel (%p19) target = $region8
    $region5: #{tpu_custom_call.1} parent=1 // loop_body
      %s23 = ssub.s32 %s18, 1
      %s24 = ssub.s32 %s18, 2
      %s25 = sadd.s32 %s18, 1
      %s26 = ssub.s32 %s18, %s25
      %p27 = scmp.eq.s32.totalorder %s26, 0
      %s29 = sadd.s32 %s28, 1
      %s30 = scalar_select %p27, %s28, %s29
      %p33 = pneg %p27
      %p34 = scmp.eq.s32.totalorder %s18, 1
      %p35 = por %p33, %p34
      %p36 = scmp.ne.s32.totalorder %s28, %s31
      %p37 = scmp.eq.s32.totalorder %s18, 0
      %p38 = por %p36, %p37
      %p39 = scmp.ne.s32.totalorder %s28, %s31
      %p40 = scmp.eq.s32.totalorder %s23, 1
      %p41 = por %p39, %p40
      %p42 = scmp.ne.s32.totalorder %s31, %s32
      %p43 = scmp.eq.s32.totalorder %s23, 0
      %p44 = por %p42, %p43
      %p45 = scmp.ne.s32.totalorder %s31, %s32
      %p46 = scmp.eq.s32.totalorder %s24, 1
      %p47 = por %p45, %p46
      %p49 = scmp.ne.s32.totalorder %s32, %s48
      %p50 = scmp.eq.s32.totalorder %s24, 0
      %p51 = por %p49, %p50
      %s53 = sadd.s32 %s52, 1
      %p56 = scmp.eq.s32.totalorder %s18, 1
      %p57 = scmp.ne.s32.totalorder %s52, %s54
      %p58 = scmp.eq.s32.totalorder %s18, 0
      %p59 = por %p57, %p58
      %p60 = scmp.ne.s32.totalorder %s52, %s54
      %p61 = scmp.eq.s32.totalorder %s23, 1
      %p62 = por %p60, %p61
      %p63 = scmp.ne.s32.totalorder %s54, %s55
      %p64 = scmp.eq.s32.totalorder %s23, 0
      %p65 = por %p63, %p64
      %p66 = scmp.ne.s32.totalorder %s54, %s55
      %p67 = scmp.eq.s32.totalorder %s24, 1
      %p68 = por %p66, %p67
      %p70 = scmp.ne.s32.totalorder %s55, %s69
      %p71 = scmp.eq.s32.totalorder %s24, 0
      %p72 = por %p70, %p71
      %s74 = sadd.s32 %s73, 1
      %p77 = scmp.eq.s32.totalorder %s18, 1
      %p78 = scmp.ne.s32.totalorder %s73, %s75
      %p79 = scmp.eq.s32.totalorder %s18, 0
      %p80 = por %p78, %p79
      %p81 = scmp.ne.s32.totalorder %s73, %s75
      %p82 = scmp.eq.s32.totalorder %s23, 1
      %p83 = por %p81, %p82
      %p84 = scmp.ne.s32.totalorder %s75, %s76
      %p85 = scmp.eq.s32.totalorder %s23, 0
      %p86 = por %p84, %p85
      %p87 = scmp.ne.s32.totalorder %s75, %s76
      %p88 = scmp.eq.s32.totalorder %s24, 1
      %p89 = por %p87, %p88
      %p91 = scmp.ne.s32.totalorder %s76, %s90
      %p92 = scmp.eq.s32.totalorder %s24, 0
      %p93 = por %p91, %p92
      %s95 = sadd.s32 %s94, 1
      %p98 = scmp.eq.s32.totalorder %s18, 1
      %p99 = scmp.ne.s32.totalorder %s94, %s96
      %p100 = scmp.eq.s32.totalorder %s18, 0
      %p101 = por %p99, %p100
      %p102 = scmp.ne.s32.totalorder %s94, %s96
      %p103 = scmp.eq.s32.totalorder %s23, 1
      %p104 = por %p102, %p103
      %p105 = scmp.ne.s32.totalorder %s96, %s97
      %p106 = scmp.eq.s32.totalorder %s23, 0
      %p107 = por %p105, %p106
      %p108 = scmp.ne.s32.totalorder %s96, %s97
      %p109 = scmp.eq.s32.totalorder %s24, 1
      %p110 = por %p108, %p109
      %p112 = scmp.ne.s32.totalorder %s97, %s111
      %p113 = scmp.eq.s32.totalorder %s24, 0
      %p114 = por %p112, %p113
      %s116 = sadd.s32 %s115, 1
      %p119 = scmp.eq.s32.totalorder %s18, 1
      %p120 = scmp.ne.s32.totalorder %s115, %s117
      %p121 = scmp.eq.s32.totalorder %s18, 0
      %p122 = por %p120, %p121
      %p123 = scmp.ne.s32.totalorder %s115, %s117
      %p124 = scmp.eq.s32.totalorder %s23, 1
      %p125 = por %p123, %p124
      %p126 = scmp.ne.s32.totalorder %s117, %s118
      %p127 = scmp.eq.s32.totalorder %s23, 0
      %p128 = por %p126, %p127
      %p129 = scmp.ne.s32.totalorder %s117, %s118
      %p130 = scmp.eq.s32.totalorder %s24, 1
      %p131 = por %p129, %p130
      %p133 = scmp.ne.s32.totalorder %s118, %s132
      %p134 = scmp.eq.s32.totalorder %s24, 0
      %p135 = por %p133, %p134
      %s136 = ssub.s32 %s18, %s25
      %p137 = scmp.eq.s32.totalorder %s136, 0
      %s139 = sadd.s32 %s138, 1
      %s140 = scalar_select %p137, %s138, %s139
      %p143 = pneg %p137
      %p144 = scmp.eq.s32.totalorder %s18, 1
      %p145 = por %p143, %p144
      %p146 = scmp.ne.s32.totalorder %s138, %s141
      %p147 = scmp.eq.s32.totalorder %s18, 0
      %p148 = por %p146, %p147
      %p149 = scmp.ne.s32.totalorder %s138, %s141
      %p150 = scmp.eq.s32.totalorder %s23, 1
      %p151 = por %p149, %p150
      %p152 = scmp.ne.s32.totalorder %s141, %s142
      %p153 = scmp.eq.s32.totalorder %s23, 0
      %p154 = por %p152, %p153
      %p155 = scmp.ne.s32.totalorder %s141, %s142
      %p156 = scmp.eq.s32.totalorder %s24, 1
      %p157 = por %p155, %p156
      %p159 = scmp.ne.s32.totalorder %s142, %s158
      %p160 = scmp.eq.s32.totalorder %s24, 0
      %p161 = por %p159, %p160
      %p162 = scmp.le.s32.totalorder 1, %s18
      %p163 = scmp.lt.s32.totalorder %s18, 3
      %p164 = pnand %p162, %p163
      %p165 = pneg %p164
      // Predicated region
      $region9: #{tpu_custom_call.1} parent=5 // pred_check
        _
      $region10: #{tpu_custom_call.1} parent=5 // pred_check_branch
        %167 = sbr.rel (%p164) target = $region12
      $region11: #{tpu_custom_call.1} parent=5 // pred_region
        %s168 = ssub.s32 %s18, 1
        // Predicated region
        $region13: #{tpu_custom_call.1} parent=11 // pred_check
          %p169 = pneg %p65
        $region14: #{tpu_custom_call.1} parent=11 // pred_check_branch
          %171 = sbr.rel (%p169) target = $region16
        $region15: #{tpu_custom_call.1} parent=11 // pred_region
          %s173 = ssub.s32 1024, 1024
          %174 = vsyncadd [#allocation6], %s173
          %s175 = sshll.u32 [#allocation5], 4
          %s176 = int_to_ptr.vmem [resolvable:$true] %s175
          %181 = dma.hbm_to_vmem [thread:$0]  %s1, 1024, %s176, [#allocation6], 64, 64, 4
        $region16: #{tpu_custom_call.1} parent=11 // pred_fallthru
          _
        // Predicated region
        $region17: #{tpu_custom_call.1} parent=11 // pred_check
          %p182 = pneg %p86
        $region18: #{tpu_custom_call.1} parent=11 // pred_check_branch
          %184 = sbr.rel (%p182) target = $region20
        $region19: #{tpu_custom_call.1} parent=11 // pred_region
          _
        $region20: #{tpu_custom_call.1} parent=11 // pred_fallthru
          _
        // Predicated region
        $region21: #{tpu_custom_call.1} parent=11 // pred_check
          %p185 = pneg %p107
        $region22: #{tpu_custom_call.1} parent=11 // pred_check_branch
          %187 = sbr.rel (%p185) target = $region24
        $region23: #{tpu_custom_call.1} parent=11 // pred_region
          _
        $region24: #{tpu_custom_call.1} parent=11 // pred_fallthru
          _
        // Predicated region
        $region25: #{tpu_custom_call.1} parent=11 // pred_check
          %p188 = pneg %p128
        $region26: #{tpu_custom_call.1} parent=11 // pred_check_branch
          %190 = sbr.rel (%p188) target = $region28
        $region27: #{tpu_custom_call.1} parent=11 // pred_region
          _
        $region28: #{tpu_custom_call.1} parent=11 // pred_fallthru
          _
      $region12: #{tpu_custom_call.1} parent=5 // pred_fallthru
        _
      %p191 = scmp.lt.s32.totalorder %s18, 2
      // Predicated region
      $region29: #{tpu_custom_call.1} parent=5 // pred_check
        %p192 = pneg %p191
      $region30: #{tpu_custom_call.1} parent=5 // pred_check_branch
        %194 = sbr.rel (%p192) target = $region32
      $region31: #{tpu_custom_call.1} parent=5 // pred_region
        // Predicated region
        $region33: #{tpu_custom_call.1} parent=31 // pred_check
          %p195 = pneg %p38
        $region34: #{tpu_custom_call.1} parent=31 // pred_check_branch
          %197 = sbr.rel (%p195) target = $region36
        $region35: #{tpu_custom_call.1} parent=31 // pred_region
          %s198 = sand.u32 %s28, 1
          %s199 = scalar_lea.sflag [#allocation3], %s198
          %s200 = sand.u32 %s28, 1
          %s201 = smul.addr %s200, 16
          %s202 = scalar_lea.vmem [#allocation2], %s201
          %s203 = smul.u32 2, %s18
          %s205 = ssub.s32 256, 256
          %206 = vsyncadd %s199, %s205
          %s207 = smul.addr %s203, 128
          %s208 = scalar_lea.hbm %s0, %s207
          %s209 = sshll.u32 %s202, 4
          %s210 = int_to_ptr.vmem [resolvable:$true] %s209
          %215 = dma.hbm_to_vmem [thread:$0]  %s208, 256, %s210, %s199, 128, 128, 8
        $region36: #{tpu_custom_call.1} parent=31 // pred_fallthru
          _
      $region32: #{tpu_custom_call.1} parent=5 // pred_fallthru
        _
      %p216 = scmp.le.s32.totalorder 1, %s18
      %p217 = scmp.lt.s32.totalorder %s18, 3
      %p218 = pnand %p216, %p217
      %p219 = pneg %p218
      // Predicated region
      $region37: #{tpu_custom_call.1} parent=5 // pred_check
        _
      $region38: #{tpu_custom_call.1} parent=5 // pred_check_branch
        %221 = sbr.rel (%p218) target = $region40
      $region39: #{tpu_custom_call.1} parent=5 // pred_region
        %s222 = ssub.s32 %s18, 1
        %s223 = sand.u32 %s31, 1
        %s224 = scalar_lea.sflag [#allocation3], %s223
        %s225 = sand.u32 %s31, 1
        %s226 = smul.addr %s225, 16
        %s227 = scalar_lea.vmem [#allocation2], %s226
        // Predicated region
        $region41: #{tpu_custom_call.1} parent=39 // pred_check
          %p228 = pneg %p44
        $region42: #{tpu_custom_call.1} parent=39 // pred_check_branch
          %230 = sbr.rel (%p228) target = $region44
        $region43: #{tpu_custom_call.1} parent=39 // pred_region
          %231 = dma.done %s224, 256
        $region44: #{tpu_custom_call.1} parent=39 // pred_fallthru
          _
        // Predicated region
        $region45: #{tpu_custom_call.1} parent=39 // pred_check
          %p232 = pneg %p65
        $region46: #{tpu_custom_call.1} parent=39 // pred_check_branch
          %234 = sbr.rel (%p232) target = $region48
        $region47: #{tpu_custom_call.1} parent=39 // pred_region
          %235 = dma.done [#allocation6], 1024
        $region48: #{tpu_custom_call.1} parent=39 // pred_fallthru
          _
        %s236 = sand.u32 %s31, 1
        %s237 = scalar_lea.sflag [#allocation3], %s236
        %s238 = sand.u32 %s31, 1
        %s239 = smul.addr %s238, 16
        %s240 = scalar_lea.vmem [#allocation2], %s239
        %p241 = pneg %p44
        %p242 = pneg %p41
        %p243 = pneg %p65
        %p244 = pneg %p62
        %p245 = pneg %p86
        %p246 = pneg %p83
        %p247 = pneg %p107
        %p248 = pneg %p104
        %p249 = pneg %p128
        %p250 = pneg %p125
        %p251 = pneg %p154
        %p252 = pneg %p151
        %s253 = sand.u32 %s141, 1
        %s254 = scalar_lea.sflag [#allocation4], %s253
        %s255 = sand.u32 %s141, 1
        %s256 = smul.addr %s255, 8
        %s257 = scalar_lea.vmem [#allocation7], %s256
        %s258 = smul.u32 2, %s23
        %s259 = smul.u32 2, %s23
        %v261 = vld [vmem:[%s227] sm:$0xff]
        %v262 = vld [vmem:[%s227 + $0x8] sm:$0xff]
        %v263 = vpack.c.bf16 %v262, %v261
        %v264 = vld [vmem:[#allocation5] sm:$0xf]
        %v265 = vld [vmem:[#allocation5 + $0x4] sm:$0xf]
        %v266 = vld [vmem:[#allocation5 + $0x8] sm:$0xf]
        %v267 = vld [vmem:[#allocation5 + $0xc] sm:$0xf]
        %v268 = vld [vmem:[#allocation5 + $0x10] sm:$0xf]
        %v269 = vld [vmem:[#allocation5 + $0x14] sm:$0xf]
        %v270 = vld [vmem:[#allocation5 + $0x18] sm:$0xf]
        %v271 = vld [vmem:[#allocation5 + $0x1c] sm:$0xf]
        %v272 = vld [vmem:[#allocation5 + $0x20] sm:$0xf]
        %v273 = vld [vmem:[#allocation5 + $0x24] sm:$0xf]
        %v274 = vld [vmem:[#allocation5 + $0x28] sm:$0xf]
        %v275 = vld [vmem:[#allocation5 + $0x2c] sm:$0xf]
        %v276 = vld [vmem:[#allocation5 + $0x30] sm:$0xf]
        %v277 = vld [vmem:[#allocation5 + $0x34] sm:$0xf]
        %v278 = vld [vmem:[#allocation5 + $0x38] sm:$0xf]
        %v279 = vld [vmem:[#allocation5 + $0x3c] sm:$0xf]
        %v280 = vld [vmem:[%s2] sm:$0x1]
        %v282 = vlaneseq
        %v283 = vshrl.u32 %v282, 7
        %v284 = vsub.s32 0, %v283
        %v285 = vrot.slane %v280, %v284
        %v303 = vunpack.c.l.b16 %v264
        %v304 = vunpack.c.l.b16 %v265
        %v305 = vunpack.c.l.b16 %v266
        %v306 = vunpack.c.l.b16 %v267
        %v307 = vunpack.c.l.b16 %v268
        %v308 = vunpack.c.l.b16 %v269
        %v309 = vunpack.c.l.b16 %v270
        %v310 = vunpack.c.l.b16 %v271
        %v311 = vunpack.c.l.b16 %v272
        %v312 = vunpack.c.l.b16 %v273
        %v313 = vunpack.c.l.b16 %v274
        %v314 = vunpack.c.l.b16 %v275
        %v315 = vunpack.c.l.b16 %v276
        %v316 = vunpack.c.l.b16 %v277
        %v317 = vunpack.c.l.b16 %v278
        %v318 = vunpack.c.l.b16 %v279
        %v319 = vpack.c.b16 %v304, %v303
        %v320 = vpack.c.b16 %v306, %v305
        %v321 = vpack.c.b16 %v308, %v307
        %v322 = vpack.c.b16 %v310, %v309
        %v323 = vpack.c.b16 %v312, %v311
        %v324 = vpack.c.b16 %v314, %v313
        %v325 = vpack.c.b16 %v316, %v315
        %v326 = vpack.c.b16 %v318, %v317
        %335 = vmatprep.subr.bf16.mxu0 0
        %336 = vmatpush1.bf16.msra.mxu0 %v319
        %337 = vmatprep.subr.bf16.mxu0 0
        %338 = vmatpush1.bf16.msra.mxu0 %v320
        %339 = vmatprep.subr.bf16.mxu0 0
        %340 = vmatpush1.bf16.msra.mxu0 %v321
        %341 = vmatprep.subr.bf16.mxu0 0
        %342 = vmatpush1.bf16.msra.mxu0 %v322
        %343 = vmatprep.subr.bf16.mxu0 0
        %344 = vmatpush1.bf16.msra.mxu0 %v323
        %345 = vmatprep.subr.bf16.mxu0 0
        %346 = vmatpush1.bf16.msra.mxu0 %v324
        %347 = vmatprep.subr.bf16.mxu0 0
        %348 = vmatpush1.bf16.msra.mxu0 %v325
        %349 = vmatprep.subr.bf16.mxu0 0
        %350 = vmatpush1.bf16.msra.mxu0 %v326
        %351 = vmatprep.subr.bf16.mxu0 0
        %352 = vmatpush1.bf16.msra.mxu0 0
        %353 = vmatprep.subr.bf16.mxu0 0
        %354 = vmatpush1.bf16.msra.mxu0 0
        %355 = vmatprep.subr.bf16.mxu0 0
        %356 = vmatpush1.bf16.msra.mxu0 0
        %357 = vmatprep.subr.bf16.mxu0 0
        %358 = vmatpush1.bf16.msra.mxu0 0
        %359 = vmatprep.subr.bf16.mxu0 0
        %360 = vmatpush1.bf16.msra.mxu0 0
        %361 = vmatprep.subr.bf16.mxu0 0
        %362 = vmatpush1.bf16.msra.mxu0 0
        %363 = vmatprep.subr.bf16.mxu0 0
        %364 = vmatpush1.bf16.msra.mxu0 0
        %365 = vmatprep.subr.bf16.mxu0 0
        %366 = vmatpush1.bf16.msra.mxu0 0
        %367 = vmatprep.mubr.bf16.mxu0 0
        %368 = vmatmul.mubr.bf16.gmra.mrb[0].mxu0 %v263
        %v369 = vpop.f32.mrb[0].mxu0
        %v370 = vadd.f32 %v285, %v369
        %v371 = vpop.f32.mrb[0].mxu0
        %v372 = vpop.f32.mrb[0].mxu0
        %v373 = vadd.f32 %v285, %v372
        %v374 = vpop.f32.mrb[0].mxu0
        %375 = vdwg.mxu0
        %v376 = vld [vmem:[%s3] sm:$0x1]
        %v377 = vld [vmem:[%s4] sm:$0x1]
        %378 = vadd.xlane.f32.xlu0 %v370
        %v379 = vpop.xlane.xlu0 %378
        %380 = vadd.xlane.f32.xlu0 %v373
        %v381 = vpop.xlane.xlu0 %380
        %v382 = vmul.f32 %v370, %v370
        %v383 = vmul.f32 %v373, %v373
        %384 = vadd.xlane.f32.xlu0 %v382
        %v385 = vpop.xlane.xlu0 %384
        %386 = vadd.xlane.f32.xlu0 %v383
        %v387 = vpop.xlane.xlu0 %386
        %v388 = vmul.f32 %v379, 0.03125
        %v389 = vmul.f32 %v381, 0.03125
        %v390 = vmul.f32 %v385, 0.03125
        %v391 = vmul.f32 %v387, 0.03125
        %v392 = vmul.f32 %v388, %v388
        %v393 = vmul.f32 %v389, %v389
        %v394 = vsub.f32 %v390, %v392
        %v395 = vsub.f32 %v391, %v393
        %v396 = vmax.f32 %v394, 0.0
        %v397 = vmax.f32 %v395, 0.0
        %v398 = vsub.f32 %v370, %v388
        %v399 = vsub.f32 %v373, %v389
        %v400 = vadd.f32 %v396, 1e-12
        %v401 = vadd.f32 %v397, 1e-12
        %v402 = vrsqrt.pop %v400
        %v403 = vrsqrt.pop %v401
        %v404 = vmul.f32 %v398, %v402
        %v405 = vmul.f32 %v399, %v403
        %v407 = vlaneseq
        %v408 = vshrl.u32 %v407, 7
        %v409 = vsub.s32 0, %v408
        %v410 = vrot.slane %v376, %v409
        %v412 = vmul.f32 %v404, %v410
        %v413 = vmul.f32 %v405, %v410
        %v415 = vlaneseq
        %v416 = vshrl.u32 %v415, 7
        %v417 = vsub.s32 0, %v416
        %v418 = vrot.slane %v377, %v417
        %v420 = vadd.f32 %v412, %v418
        %v421 = vadd.f32 %v413, %v418
        %v422 = vpack.c.bf16 %v421, %v420
        %v424 = vunpack.c.l.b16 %v422
        %v425 = vunpack.c.h.b16 %v422
        %v426 = vpack.c.b16 %v424, %v424
        %v427 = vpack.c.b16 %v425, %v425
        %430 = vst [vmem:[%s257] sm:$0xf] %v426
        %431 = vst [vmem:[%s257 + $0x4] sm:$0xf] %v427
        %s432 = sand.u32 %s141, 1
        %s433 = scalar_lea.sflag [#allocation4], %s432
        %s434 = sand.u32 %s141, 1
        %s435 = smul.addr %s434, 8
        %s436 = scalar_lea.vmem [#allocation7], %s435
        // Predicated region
        $region49: #{tpu_custom_call.1} parent=39 // pred_check
          %p437 = pneg %p151
        $region50: #{tpu_custom_call.1} parent=39 // pred_check_branch
          %439 = sbr.rel (%p437) target = $region52
        $region51: #{tpu_custom_call.1} parent=39 // pred_region
          %s440 = smul.u32 2, %s23
          %s442 = ssub.s32 128, 128
          %443 = vsyncadd %s433, %s442
          %s444 = smul.addr %s440, 64
          %s445 = scalar_lea.hbm %s5, %s444
          %s446 = sshll.u32 %s436, 4
          %s447 = int_to_ptr.vmem [resolvable:$true] %s446
          %452 = dma.vmem_to_hbm [thread:$0]  %s447, 128, %s445, %s433, 64, 64, 4
        $region52: #{tpu_custom_call.1} parent=39 // pred_fallthru
          _
      $region40: #{tpu_custom_call.1} parent=5 // pred_fallthru
        _
      %p453 = scmp.le.s32.totalorder 2, %s18
      // Predicated region
      $region53: #{tpu_custom_call.1} parent=5 // pred_check
        %p454 = pneg %p453
      $region54: #{tpu_custom_call.1} parent=5 // pred_check_branch
        %456 = sbr.rel (%p454) target = $region56
      $region55: #{tpu_custom_call.1} parent=5 // pred_region
        %s457 = ssub.s32 %s18, 2
        // Predicated region
        $region57: #{tpu_custom_call.1} parent=55 // pred_check
          %p458 = pneg %p157
        $region58: #{tpu_custom_call.1} parent=55 // pred_check_branch
          %460 = sbr.rel (%p458) target = $region60
        $region59: #{tpu_custom_call.1} parent=55 // pred_region
          %s461 = sand.u32 %s142, 1
          %s462 = scalar_lea.sflag [#allocation4], %s461
          %s463 = sand.u32 %s142, 1
          %s464 = smul.addr %s463, 8
          %s465 = scalar_lea.vmem [#allocation7], %s464
          %466 = dma.done %s462, 128
        $region60: #{tpu_custom_call.1} parent=55 // pred_fallthru
          _
      $region56: #{tpu_custom_call.1} parent=5 // pred_fallthru
        _
    $region6: #{tpu_custom_call.1} parent=1 // loop_footer
      %s22 = sadd.s32 1, %s18
    $region7: #{tpu_custom_call.1} parent=1 // loop_footer_branch
      %17 = sbr.rel target = $region3
    $region8: #{tpu_custom_call.1} parent=1 // loop_exit
      _
    %467 = vsyncpa [#allocation3], 1
    %s468 = scalar_lea.sflag [#allocation3], 1
    %469 = vsyncpa %s468, 1
    %470 = vsyncpa [#allocation6], 1
    %471 = vsyncpa [#allocation4], 1
    %s472 = scalar_lea.sflag [#allocation4], 1
    %473 = vsyncpa %s472, 1

</llo_original>
